<compile_context>
chip_gen: v7x
topology: tpu7x:2x2x1
jax: 0.10.0
libtpu: 0.0.40
codegen_flags: <defaults>
</compile_context>

<pallas_src>
import math

import jax
import jax.numpy as jnp
from jax.experimental import pallas as pl
from jax.experimental.pallas import tpu as pltpu

_LANE = 128
_MIB = 1024 * 1024
# Below this many flops, XLA's fused dot beats the fixed pallas_call overhead.
_FALLBACK_FLOPS = 1 << 22


# --------------------------------------------------------------------------
# Kernels
# --------------------------------------------------------------------------
def _matmul_acc_kernel(x_ref, w_ref, o_ref, acc_ref):
    """Grid (M, N, K) with K innermost; f32 VMEM accumulator across K."""
    k = pl.program_id(2)

    @pl.when(k == 0)
    def _():
        acc_ref[...] = jnp.zeros_like(acc_ref)

    acc_ref[...] += jnp.dot(
        x_ref[...], w_ref[...], preferred_element_type=jnp.float32
    )

    @pl.when(k == pl.num_programs(2) - 1)
    def _():
        o_ref[...] = acc_ref[...].astype(o_ref.dtype)


def _matmul_kernel(x_ref, w_ref, o_ref):
    """Grid (M, N); full-K contraction per step, no scratch accumulator."""
    o_ref[...] = jnp.dot(
        x_ref[...], w_ref[...], preferred_element_type=jnp.float32
    ).astype(o_ref.dtype)


# --------------------------------------------------------------------------
# Tile selection (sized for the tightest generation: v7x, 64 MiB VMEM)
# --------------------------------------------------------------------------
def _select_tiles(m, k, n, in_itemsize, out_itemsize):
    """Return (tm, tn, tk, vmem_footprint_bytes)."""
    tm = min(512, m)
    tn = min(512, n)  # n is a multiple of 128 on the pallas path

    # Split K only when the double-buffered full-K slabs are too big, and only
    # with exact divisibility so padded garbage never enters the reduction.
    def slab_bytes(tk_):
        return 2 * (tm * tk_ + tk_ * tn) * in_itemsize

    if k <= 1024 or slab_bytes(k) <= 16 * _MIB:
        tk = k
    else:
        tk = k  # non-divisible large K: keep full extent (still correct)
        for cand in (512, 256, 128):
            if k % cand == 0:
                tk = cand
                break

    def footprint(tm_):
        fb = 2 * (tm_ * tk + tk * tn) * in_itemsize     # double-buffered inputs
        fb += 2 * tm_ * tn * out_itemsize               # double-buffered output
        if tk != k:
            fb += tm_ * tn * 4                          # f32 accumulator scratch
        return fb

    # Shrink tm until comfortably inside v7x's 64 MiB physical VMEM.
    while tm > 128 and footprint(tm) > 40 * _MIB:
        tm //= 2
    return tm, tn, tk, footprint(tm)


# --------------------------------------------------------------------------
# Wrapper
# --------------------------------------------------------------------------
def value_forward(x, weight):
    """x: [..., dim_input]; weight: [dim_val, dim_input] (nn.Linear layout)."""
    dim_val, dim_input = weight.shape
    lead_shape = x.shape[:-1]
    m = math.prod(lead_shape) if lead_shape else 1
    out_dtype = x.dtype
    x2d = x.reshape(m, dim_input)

    flops = 2 * m * dim_input * dim_val
    # Small shapes or lane-sparse outputs (dim_val not a multiple of 128):
    # XLA's fused dot is strictly faster than a pallas_call here.
    if flops < _FALLBACK_FLOPS or dim_val % _LANE != 0:
        out = jnp.dot(
            x2d, weight.T, preferred_element_type=jnp.float32
        ).astype(out_dtype)
        return out.reshape(*lead_shape, dim_val)

    # One-time HBM transpose to canonical [K, N]; amortized over the grid,
    # avoids per-step XLU relayout of the (grid-constant) weight tile.
    wt = weight.T  # [dim_input, dim_val]

    in_itemsize = max(jnp.dtype(x.dtype).itemsize, jnp.dtype(weight.dtype).itemsize)
    w_itemsize = jnp.dtype(weight.dtype).itemsize
    out_itemsize = jnp.dtype(out_dtype).itemsize

    tm, tn, tk, footprint = _select_tiles(
        m, dim_input, dim_val, in_itemsize, out_itemsize
    )
    if footprint > 48 * _MIB:
        # Degenerate shape (huge non-divisible K): let XLA handle it.
        out = jnp.dot(x2d, wt, preferred_element_type=jnp.float32).astype(out_dtype)
        return out.reshape(*lead_shape, dim_val)

    m_tiles = pl.cdiv(m, tm)
    n_tiles = pl.cdiv(dim_val, tn)
    k_split = tk != dim_input

    cost = pl.CostEstimate(
        flops=flops,
        transcendentals=0,
        bytes_accessed=(
            m * dim_input * jnp.dtype(x.dtype).itemsize * n_tiles  # x per N tile
            + dim_input * dim_val * w_itemsize * m_tiles           # W per M tile
            + m * dim_val * out_itemsize
        ),
    )
    compiler_params = pltpu.CompilerParams(
        dimension_semantics=(
            ("parallel", "parallel", "arbitrary") if k_split
            else ("parallel", "parallel")
        ),
        vmem_limit_bytes=int(min(footprint + 4 * _MIB, 64 * _MIB)),
    )
    out_shape = jax.ShapeDtypeStruct((m, dim_val), out_dtype)

    if k_split:
        grid = (m_tiles, n_tiles, dim_input // tk)
        out = pl.pallas_call(
            _matmul_acc_kernel,
            out_shape=out_shape,
            grid_spec=pltpu.PrefetchScalarGridSpec(
                num_scalar_prefetch=0,
                grid=grid,
                in_specs=[
                    pl.BlockSpec((tm, tk), lambda i, j, k: (i, k)),
                    pl.BlockSpec((tk, tn), lambda i, j, k: (k, j)),
                ],
                out_specs=pl.BlockSpec((tm, tn), lambda i, j, k: (i, j)),
                scratch_shapes=[pltpu.VMEM((tm, tn), jnp.float32)],
            ),
            compiler_params=compiler_params,
            cost_estimate=cost,
        )(x2d, wt)
    else:
        grid = (m_tiles, n_tiles)
        out = pl.pallas_call(
            _matmul_kernel,
            out_shape=out_shape,
            grid_spec=pltpu.PrefetchScalarGridSpec(
                num_scalar_prefetch=0,
                grid=grid,
                in_specs=[
                    pl.BlockSpec((tm, dim_input), lambda i, j: (i, 0)),
                    pl.BlockSpec((dim_input, tn), lambda i, j: (0, j)),
                ],
                out_specs=pl.BlockSpec((tm, tn), lambda i, j: (i, j)),
            ),
            compiler_params=compiler_params,
            cost_estimate=cost,
        )(x2d, wt)

    return out.reshape(*lead_shape, dim_val)


# --------------------------------------------------------------------------
# Demo / correctness check
# --------------------------------------------------------------------------
if __name__ == "__main__":
    def make_case(case_key, batch, seq, dim_input, dim_val):
        kx, kw = jax.random.split(case_key)
        x = jax.random.normal(kx, (batch, seq, dim_input), dtype=jnp.float32)
        bound = 1.0 / math.sqrt(dim_input)  # nn.Linear kaiming-uniform bound
        w = jax.random.uniform(
            kw, (dim_val, dim_input), minval=-bound, maxval=bound,
            dtype=jnp.float32,
        )
        return x, w

    cases = [
        (2, 8, 32, 32),       # module-spec tiny shape -> XLA-dot fallback path
        (2, 256, 256, 256),   # pallas path, single full-K block, no scratch
        (2, 256, 4096, 256),  # pallas path, K-split f32-accumulator kernel
    ]
    keys = jax.random.split(jax.random.PRNGKey(0), len(cases))
    for case_key, (b, s, di, dv) in zip(keys, cases):
        x, w = make_case(case_key, b, s, di, dv)
        out = jax.block_until_ready(value_forward(x, w))
        ref = jnp.einsum(
            "bsk,nk->bsn", x, w, precision=jax.lax.Precision.HIGHEST
        )
        assert out.shape == (b, s, dv), (out.shape, (b, s, dv))
        assert jnp.allclose(out, ref, atol=1e-2, rtol=1e-2), (b, s, di, dv)

    print("KERNEL_OK")
</pallas_src>

<mosaic_0001>
module attributes {stable_mosaic.version = 11 : i64} {
  func.func @_matmul_kernel(%arg0: i32, %arg1: i32, %arg2: memref<512x256xf32, #tpu.memory_space<vmem>>, %arg3: memref<256x256xf32, #tpu.memory_space<vmem>>, %arg4: memref<512x256xf32, #tpu.memory_space<vmem>>) attributes {dimension_semantics = [#tpu.dimension_semantics<parallel>, #tpu.dimension_semantics<parallel>], iteration_bounds = array<i64: 1, 1>, scalar_prefetch = 0 : i64, scratch_operands = 0 : i64, tpu.core_type = #tpu.core_type<tc>, window_params = [{transform_indices = @transform_0, window_bounds = array<i64: 512, 256>}, {transform_indices = @transform_1, window_bounds = array<i64: 256, 256>}, {transform_indices = @transform_2, window_bounds = array<i64: 512, 256>}]} {
    %c0 = arith.constant 0 : index
    %c0_0 = arith.constant 0 : index
    %0 = vector.load %arg2[%c0, %c0_0] : memref<512x256xf32, #tpu.memory_space<vmem>>, vector<512x256xf32>
    %c0_1 = arith.constant 0 : index
    %c0_2 = arith.constant 0 : index
    %1 = vector.load %arg3[%c0_1, %c0_2] : memref<256x256xf32, #tpu.memory_space<vmem>>, vector<256x256xf32>
    %cst = arith.constant dense<0.000000e+00> : vector<512x256xf32>
    %2 = tpu.matmul %0, %1, %cst {dimension_numbers = #tpu.dot_dimension_numbers<[1], [0], [0], [1], [0, 0, 1, 1], [], []>} : vector<512x256xf32>, vector<256x256xf32>, vector<512x256xf32> -> vector<512x256xf32>
    %c0_3 = arith.constant 0 : index
    %c0_4 = arith.constant 0 : index
    %3 = vector.load %arg4[%c0_3, %c0_4] : memref<512x256xf32, #tpu.memory_space<vmem>>, vector<512x256xf32>
    tpu.vector_store %arg4[%c0_3, %c0_4], %2 {strides = array<i32>} : memref<512x256xf32, #tpu.memory_space<vmem>>, vector<512x256xf32>,
    return
  }
  func.func @transform_0(%arg0: i32, %arg1: i32) -> (i32, i32) {
    %c0_i32 = arith.constant 0 : i32
    %c0_i32_0 = arith.constant 0 : i32
    return %arg0, %c0_i32 : i32, i32
  }
  func.func @transform_1(%arg0: i32, %arg1: i32) -> (i32, i32) {
    %c0_i32 = arith.constant 0 : i32
    %c0_i32_0 = arith.constant 0 : i32
    return %c0_i32, %arg1 : i32, i32
  }
  func.func @transform_2(%arg0: i32, %arg1: i32) -> (i32, i32) {
    %c0_i32 = arith.constant 0 : i32
    return %arg0, %arg1 : i32, i32
  }
}

</mosaic_0001>

<llo_original>
// kernel: tpu_custom_call.1
$region0: #{tpu_custom_call.1}
  #allocation0 [shape = 'u32[]', space=smem, size = 0x4, offset = 0x4, fixed_abs, tag = 'smem constant byte address 0x4 - core index']
  #allocation1 [shape = 'u32[144,128]{1,0:T(1,128)}', space=vmem, size = 0x12000, scoped, tag = 'internal scratch']
  %s0 = inlined_call_operand.hbm [shape: f32[512,256], index: 0, kind: input, shape index: {}]
  %s1 = inlined_call_operand.hbm [shape: f32[256,256], index: 1, kind: input, shape index: {}]
  %s2 = inlined_call_operand.hbm [shape: f32[512,256], index: 2, kind: output, shape index: {}]
  %s3 = sld [smem:[#allocation0]]
  $region26: #{tpu_custom_call.1} parent=0
    _
  %s5 = ssub.s32 1, %s3
  %s6 = scalar_select 0, %s5, %s3
  $region1: #{tpu_custom_call.1} parent=0
    #allocation2 [shape = 'u8[524288]{0}', space=vmem, size = 0x80000, scoped, tag = 'input window, operand 0, single buffered']
    #allocation3 [shape = 's32[1]{0}', space=sflag, size = 0x4, scoped, tag = 'scoped memory for tpu_custom_call.1']
    #allocation4 [shape = 's32[1]{0}', space=sflag, size = 0x4, scoped, tag = 'scoped memory for tpu_custom_call.1']
    #allocation5 [shape = 'u8[262144]{0}', space=vmem, size = 0x40000, scoped, tag = 'input window, operand 1, single buffered']
    #allocation6 [shape = 's32[1]{0}', space=sflag, size = 0x4, scoped, tag = 'scoped memory for tpu_custom_call.1']
    #allocation7 [shape = 'u8[524288]{0}', space=vmem, size = 0x80000, scoped, tag = 'output window, operand 0, single buffered']
    %7 = vsyncpa [#allocation3], 0
    %8 = vsyncpa [#allocation6], 0
    %9 = vsyncpa [#allocation4], 0
    // Predicated region
    $region2: #{tpu_custom_call.1} parent=1 // pred_check
      _
    $region3: #{tpu_custom_call.1} parent=1 // pred_check_branch
      %11 = sbr.rel (0) target = $region5
    $region4: #{tpu_custom_call.1} parent=1 // pred_region
      %s13 = ssub.s32 16384, 16384
      %14 = vsyncadd [#allocation3], %s13
      %s15 = sshll.u32 [#allocation2], 4
      %s16 = int_to_ptr.vmem [resolvable:$true] %s15
      %21 = dma.hbm_to_vmem [thread:$0]  %s0, 16384, %s16, [#allocation3], 256, 256, 16
    $region5: #{tpu_custom_call.1} parent=1 // pred_fallthru
      _
    // Predicated region
    $region6: #{tpu_custom_call.1} parent=1 // pred_check
      _
    $region7: #{tpu_custom_call.1} parent=1 // pred_check_branch
      %23 = sbr.rel (0) target = $region9
    $region8: #{tpu_custom_call.1} parent=1 // pred_region
      %s25 = ssub.s32 8192, 8192
      %26 = vsyncadd [#allocation6], %s25
      %s27 = sshll.u32 [#allocation5], 4
      %s28 = int_to_ptr.vmem [resolvable:$true] %s27
      %33 = dma.hbm_to_vmem [thread:$0]  %s1, 8192, %s28, [#allocation6], 256, 256, 16
    $region9: #{tpu_custom_call.1} parent=1 // pred_fallthru
      _
    // Predicated region
    $region10: #{tpu_custom_call.1} parent=1 // pred_check
      _
    $region11: #{tpu_custom_call.1} parent=1 // pred_check_branch
      %35 = sbr.rel (0) target = $region13
    $region12: #{tpu_custom_call.1} parent=1 // pred_region
      %36 = dma.done [#allocation3], 16384
    $region13: #{tpu_custom_call.1} parent=1 // pred_fallthru
      _
    // Predicated region
    $region14: #{tpu_custom_call.1} parent=1 // pred_check
      _
    $region15: #{tpu_custom_call.1} parent=1 // pred_check_branch
      %38 = sbr.rel (0) target = $region17
    $region16: #{tpu_custom_call.1} parent=1 // pred_region
      %39 = dma.done [#allocation6], 8192
    $region17: #{tpu_custom_call.1} parent=1 // pred_fallthru
      _
    %v40 = vld [vmem:[#allocation2] sm:$0xff]
    %v41 = vld [vmem:[#allocation2 + $0x8] sm:$0xff]
    %v42 = vld [vmem:[#allocation2 + $0x10] sm:$0xff]
    %v43 = vld [vmem:[#allocation2 + $0x18] sm:$0xff]
    %v44 = vld [vmem:[#allocation2 + $0x20] sm:$0xff]
    %v45 = vld [vmem:[#allocation2 + $0x28] sm:$0xff]
    %v46 = vld [vmem:[#allocation2 + $0x30] sm:$0xff]
    %v47 = vld [vmem:[#allocation2 + $0x38] sm:$0xff]
    %v48 = vld [vmem:[#allocation2 + $0x40] sm:$0xff]
    %v49 = vld [vmem:[#allocation2 + $0x48] sm:$0xff]
    %v50 = vld [vmem:[#allocation2 + $0x50] sm:$0xff]
    %v51 = vld [vmem:[#allocation2 + $0x58] sm:$0xff]
    %v52 = vld [vmem:[#allocation2 + $0x60] sm:$0xff]
    %v53 = vld [vmem:[#allocation2 + $0x68] sm:$0xff]
    %v54 = vld [vmem:[#allocation2 + $0x70] sm:$0xff]
    %v55 = vld [vmem:[#allocation2 + $0x78] sm:$0xff]
    %v56 = vld [vmem:[#allocation2 + $0x80] sm:$0xff]
    %v57 = vld [vmem:[#allocation2 + $0x88] sm:$0xff]
    %v58 = vld [vmem:[#allocation2 + $0x90] sm:$0xff]
    %v59 = vld [vmem:[#allocation2 + $0x98] sm:$0xff]
    %v60 = vld [vmem:[#allocation2 + $0xa0] sm:$0xff]
    %v61 = vld [vmem:[#allocation2 + $0xa8] sm:$0xff]
    %v62 = vld [vmem:[#allocation2 + $0xb0] sm:$0xff]
    %v63 = vld [vmem:[#allocation2 + $0xb8] sm:$0xff]
    %v64 = vld [vmem:[#allocation2 + $0xc0] sm:$0xff]
    %v65 = vld [vmem:[#allocation2 + $0xc8] sm:$0xff]
    %v66 = vld [vmem:[#allocation2 + $0xd0] sm:$0xff]
    %v67 = vld [vmem:[#allocation2 + $0xd8] sm:$0xff]
    %v68 = vld [vmem:[#allocation2 + $0xe0] sm:$0xff]
    %v69 = vld [vmem:[#allocation2 + $0xe8] sm:$0xff]
    %v70 = vld [vmem:[#allocation2 + $0xf0] sm:$0xff]
    %v71 = vld [vmem:[#allocation2 + $0xf8] sm:$0xff]
    %v72 = vld [vmem:[#allocation2 + $0x100] sm:$0xff]
    %v73 = vld [vmem:[#allocation2 + $0x108] sm:$0xff]
    %v74 = vld [vmem:[#allocation2 + $0x110] sm:$0xff]
    %v75 = vld [vmem:[#allocation2 + $0x118] sm:$0xff]
    %v76 = vld [vmem:[#allocation2 + $0x120] sm:$0xff]
    %v77 = vld [vmem:[#allocation2 + $0x128] sm:$0xff]
    %v78 = vld [vmem:[#allocation2 + $0x130] sm:$0xff]
    %v79 = vld [vmem:[#allocation2 + $0x138] sm:$0xff]
    %v80 = vld [vmem:[#allocation2 + $0x140] sm:$0xff]
    %v81 = vld [vmem:[#allocation2 + $0x148] sm:$0xff]
    %v82 = vld [vmem:[#allocation2 + $0x150] sm:$0xff]
    %v83 = vld [vmem:[#allocation2 + $0x158] sm:$0xff]
    %v84 = vld [vmem:[#allocation2 + $0x160] sm:$0xff]
    %v85 = vld [vmem:[#allocation2 + $0x168] sm:$0xff]
    %v86 = vld [vmem:[#allocation2 + $0x170] sm:$0xff]
    %v87 = vld [vmem:[#allocation2 + $0x178] sm:$0xff]
    %v88 = vld [vmem:[#allocation2 + $0x180] sm:$0xff]
    %v89 = vld [vmem:[#allocation2 + $0x188] sm:$0xff]
    %v90 = vld [vmem:[#allocation2 + $0x190] sm:$0xff]
    %v91 = vld [vmem:[#allocation2 + $0x198] sm:$0xff]
    %v92 = vld [vmem:[#allocation2 + $0x1a0] sm:$0xff]
    %v93 = vld [vmem:[#allocation2 + $0x1a8] sm:$0xff]
    %v94 = vld [vmem:[#allocation2 + $0x1b0] sm:$0xff]
    %v95 = vld [vmem:[#allocation2 + $0x1b8] sm:$0xff]
    %v96 = vld [vmem:[#allocation2 + $0x1c0] sm:$0xff]
    %v97 = vld [vmem:[#allocation2 + $0x1c8] sm:$0xff]
    %v98 = vld [vmem:[#allocation2 + $0x1d0] sm:$0xff]
    %v99 = vld [vmem:[#allocation2 + $0x1d8] sm:$0xff]
    %v100 = vld [vmem:[#allocation2 + $0x1e0] sm:$0xff]
    %v101 = vld [vmem:[#allocation2 + $0x1e8] sm:$0xff]
    %v102 = vld [vmem:[#allocation2 + $0x1f0] sm:$0xff]
    %v103 = vld [vmem:[#allocation2 + $0x1f8] sm:$0xff]
    %v104 = vld [vmem:[#allocation2 + $0x200] sm:$0xff]
    %v105 = vld [vmem:[#allocation2 + $0x208] sm:$0xff]
    %v106 = vld [vmem:[#allocation2 + $0x210] sm:$0xff]
    %v107 = vld [vmem:[#allocation2 + $0x218] sm:$0xff]
    %v108 = vld [vmem:[#allocation2 + $0x220] sm:$0xff]
    %v109 = vld [vmem:[#allocation2 + $0x228] sm:$0xff]
    %v110 = vld [vmem:[#allocation2 + $0x230] sm:$0xff]
    %v111 = vld [vmem:[#allocation2 + $0x238] sm:$0xff]
    %v112 = vld [vmem:[#allocation2 + $0x240] sm:$0xff]
    %v113 = vld [vmem:[#allocation2 + $0x248] sm:$0xff]
    %v114 = vld [vmem:[#allocation2 + $0x250] sm:$0xff]
    %v115 = vld [vmem:[#allocation2 + $0x258] sm:$0xff]
    %v116 = vld [vmem:[#allocation2 + $0x260] sm:$0xff]
    %v117 = vld [vmem:[#allocation2 + $0x268] sm:$0xff]
    %v118 = vld [vmem:[#allocation2 + $0x270] sm:$0xff]
    %v119 = vld [vmem:[#allocation2 + $0x278] sm:$0xff]
    %v120 = vld [vmem:[#allocation2 + $0x280] sm:$0xff]
    %v121 = vld [vmem:[#allocation2 + $0x288] sm:$0xff]
    %v122 = vld [vmem:[#allocation2 + $0x290] sm:$0xff]
    %v123 = vld [vmem:[#allocation2 + $0x298] sm:$0xff]
    %v124 = vld [vmem:[#allocation2 + $0x2a0] sm:$0xff]
    %v125 = vld [vmem:[#allocation2 + $0x2a8] sm:$0xff]
    %v126 = vld [vmem:[#allocation2 + $0x2b0] sm:$0xff]
    %v127 = vld [vmem:[#allocation2 + $0x2b8] sm:$0xff]
    %v128 = vld [vmem:[#allocation2 + $0x2c0] sm:$0xff]
    %v129 = vld [vmem:[#allocation2 + $0x2c8] sm:$0xff]
    %v130 = vld [vmem:[#allocation2 + $0x2d0] sm:$0xff]
    %v131 = vld [vmem:[#allocation2 + $0x2d8] sm:$0xff]
    %v132 = vld [vmem:[#allocation2 + $0x2e0] sm:$0xff]
    %v133 = vld [vmem:[#allocation2 + $0x2e8] sm:$0xff]
    %v134 = vld [vmem:[#allocation2 + $0x2f0] sm:$0xff]
    %v135 = vld [vmem:[#allocation2 + $0x2f8] sm:$0xff]
    %v136 = vld [vmem:[#allocation2 + $0x300] sm:$0xff]
    %v137 = vld [vmem:[#allocation2 + $0x308] sm:$0xff]
    %v138 = vld [vmem:[#allocation2 + $0x310] sm:$0xff]
    %v139 = vld [vmem:[#allocation2 + $0x318] sm:$0xff]
    %v140 = vld [vmem:[#allocation2 + $0x320] sm:$0xff]
    %v141 = vld [vmem:[#allocation2 + $0x328] sm:$0xff]
    %v142 = vld [vmem:[#allocation2 + $0x330] sm:$0xff]
    %v143 = vld [vmem:[#allocation2 + $0x338] sm:$0xff]
    %v144 = vld [vmem:[#allocation2 + $0x340] sm:$0xff]
    %v145 = vld [vmem:[#allocation2 + $0x348] sm:$0xff]
    %v146 = vld [vmem:[#allocation2 + $0x350] sm:$0xff]
    %v147 = vld [vmem:[#allocation2 + $0x358] sm:$0xff]
    %v148 = vld [vmem:[#allocation2 + $0x360] sm:$0xff]
    %v149 = vld [vmem:[#allocation2 + $0x368] sm:$0xff]
    %v150 = vld [vmem:[#allocation2 + $0x370] sm:$0xff]
    %v151 = vld [vmem:[#allocation2 + $0x378] sm:$0xff]
    %v152 = vld [vmem:[#allocation2 + $0x380] sm:$0xff]
    %v153 = vld [vmem:[#allocation2 + $0x388] sm:$0xff]
    %v154 = vld [vmem:[#allocation2 + $0x390] sm:$0xff]
    %v155 = vld [vmem:[#allocation2 + $0x398] sm:$0xff]
    %v156 = vld [vmem:[#allocation2 + $0x3a0] sm:$0xff]
    %v157 = vld [vmem:[#allocation2 + $0x3a8] sm:$0xff]
    %v158 = vld [vmem:[#allocation2 + $0x3b0] sm:$0xff]
    %v159 = vld [vmem:[#allocation2 + $0x3b8] sm:$0xff]
    %v160 = vld [vmem:[#allocation2 + $0x3c0] sm:$0xff]
    %v161 = vld [vmem:[#allocation2 + $0x3c8] sm:$0xff]
    %v162 = vld [vmem:[#allocation2 + $0x3d0] sm:$0xff]
    %v163 = vld [vmem:[#allocation2 + $0x3d8] sm:$0xff]
    %v164 = vld [vmem:[#allocation2 + $0x3e0] sm:$0xff]
    %v165 = vld [vmem:[#allocation2 + $0x3e8] sm:$0xff]
    %v166 = vld [vmem:[#allocation2 + $0x3f0] sm:$0xff]
    %v167 = vld [vmem:[#allocation2 + $0x3f8] sm:$0xff]
    %v168 = vld [vmem:[#allocation5] sm:$0xff]
    %v169 = vld [vmem:[#allocation5 + $0x8] sm:$0xff]
    %v170 = vld [vmem:[#allocation5 + $0x10] sm:$0xff]
    %v171 = vld [vmem:[#allocation5 + $0x18] sm:$0xff]
    %v172 = vld [vmem:[#allocation5 + $0x20] sm:$0xff]
    %v173 = vld [vmem:[#allocation5 + $0x28] sm:$0xff]
    %v174 = vld [vmem:[#allocation5 + $0x30] sm:$0xff]
    %v175 = vld [vmem:[#allocation5 + $0x38] sm:$0xff]
    %v176 = vld [vmem:[#allocation5 + $0x40] sm:$0xff]
    %v177 = vld [vmem:[#allocation5 + $0x48] sm:$0xff]
    %v178 = vld [vmem:[#allocation5 + $0x50] sm:$0xff]
    %v179 = vld [vmem:[#allocation5 + $0x58] sm:$0xff]
    %v180 = vld [vmem:[#allocation5 + $0x60] sm:$0xff]
    %v181 = vld [vmem:[#allocation5 + $0x68] sm:$0xff]
    %v182 = vld [vmem:[#allocation5 + $0x70] sm:$0xff]
    %v183 = vld [vmem:[#allocation5 + $0x78] sm:$0xff]
    %v184 = vld [vmem:[#allocation5 + $0x80] sm:$0xff]
    %v185 = vld [vmem:[#allocation5 + $0x88] sm:$0xff]
    %v186 = vld [vmem:[#allocation5 + $0x90] sm:$0xff]
    %v187 = vld [vmem:[#allocation5 + $0x98] sm:$0xff]
    %v188 = vld [vmem:[#allocation5 + $0xa0] sm:$0xff]
    %v189 = vld [vmem:[#allocation5 + $0xa8] sm:$0xff]
    %v190 = vld [vmem:[#allocation5 + $0xb0] sm:$0xff]
    %v191 = vld [vmem:[#allocation5 + $0xb8] sm:$0xff]
    %v192 = vld [vmem:[#allocation5 + $0xc0] sm:$0xff]
    %v193 = vld [vmem:[#allocation5 + $0xc8] sm:$0xff]
    %v194 = vld [vmem:[#allocation5 + $0xd0] sm:$0xff]
    %v195 = vld [vmem:[#allocation5 + $0xd8] sm:$0xff]
    %v196 = vld [vmem:[#allocation5 + $0xe0] sm:$0xff]
    %v197 = vld [vmem:[#allocation5 + $0xe8] sm:$0xff]
    %v198 = vld [vmem:[#allocation5 + $0xf0] sm:$0xff]
    %v199 = vld [vmem:[#allocation5 + $0xf8] sm:$0xff]
    %v200 = vld [vmem:[#allocation5 + $0x100] sm:$0xff]
    %v201 = vld [vmem:[#allocation5 + $0x108] sm:$0xff]
    %v202 = vld [vmem:[#allocation5 + $0x110] sm:$0xff]
    %v203 = vld [vmem:[#allocation5 + $0x118] sm:$0xff]
    %v204 = vld [vmem:[#allocation5 + $0x120] sm:$0xff]
    %v205 = vld [vmem:[#allocation5 + $0x128] sm:$0xff]
    %v206 = vld [vmem:[#allocation5 + $0x130] sm:$0xff]
    %v207 = vld [vmem:[#allocation5 + $0x138] sm:$0xff]
    %v208 = vld [vmem:[#allocation5 + $0x140] sm:$0xff]
    %v209 = vld [vmem:[#allocation5 + $0x148] sm:$0xff]
    %v210 = vld [vmem:[#allocation5 + $0x150] sm:$0xff]
    %v211 = vld [vmem:[#allocation5 + $0x158] sm:$0xff]
    %v212 = vld [vmem:[#allocation5 + $0x160] sm:$0xff]
    %v213 = vld [vmem:[#allocation5 + $0x168] sm:$0xff]
    %v214 = vld [vmem:[#allocation5 + $0x170] sm:$0xff]
    %v215 = vld [vmem:[#allocation5 + $0x178] sm:$0xff]
    %v216 = vld [vmem:[#allocation5 + $0x180] sm:$0xff]
    %v217 = vld [vmem:[#allocation5 + $0x188] sm:$0xff]
    %v218 = vld [vmem:[#allocation5 + $0x190] sm:$0xff]
    %v219 = vld [vmem:[#allocation5 + $0x198] sm:$0xff]
    %v220 = vld [vmem:[#allocation5 + $0x1a0] sm:$0xff]
    %v221 = vld [vmem:[#allocation5 + $0x1a8] sm:$0xff]
    %v222 = vld [vmem:[#allocation5 + $0x1b0] sm:$0xff]
    %v223 = vld [vmem:[#allocation5 + $0x1b8] sm:$0xff]
    %v224 = vld [vmem:[#allocation5 + $0x1c0] sm:$0xff]
    %v225 = vld [vmem:[#allocation5 + $0x1c8] sm:$0xff]
    %v226 = vld [vmem:[#allocation5 + $0x1d0] sm:$0xff]
    %v227 = vld [vmem:[#allocation5 + $0x1d8] sm:$0xff]
    %v228 = vld [vmem:[#allocation5 + $0x1e0] sm:$0xff]
    %v229 = vld [vmem:[#allocation5 + $0x1e8] sm:$0xff]
    %v230 = vld [vmem:[#allocation5 + $0x1f0] sm:$0xff]
    %v231 = vld [vmem:[#allocation5 + $0x1f8] sm:$0xff]
    %232 = vmatprep.subr.mxu0 %v169
    %233 = vmatpush1.msra.mxu0 %v168
    %234 = vmatprep.subr.mxu0 %v171
    %235 = vmatpush1.msra.mxu0 %v170
    %236 = vmatprep.subr.mxu0 %v173
    %237 = vmatpush1.msra.mxu0 %v172
    %238 = vmatprep.subr.mxu0 %v175
    %239 = vmatpush1.msra.mxu0 %v174
    %240 = vmatprep.subr.mxu0 %v177
    %241 = vmatpush1.msra.mxu0 %v176
    %242 = vmatprep.subr.mxu0 %v179
    %243 = vmatpush1.msra.mxu0 %v178
    %244 = vmatprep.subr.mxu0 %v181
    %245 = vmatpush1.msra.mxu0 %v180
    %246 = vmatprep.subr.mxu0 %v183
    %247 = vmatpush1.msra.mxu0 %v182
    %248 = vmatprep.subr.mxu0 %v185
    %249 = vmatpush1.msra.mxu0 %v184
    %250 = vmatprep.subr.mxu0 %v187
    %251 = vmatpush1.msra.mxu0 %v186
    %252 = vmatprep.subr.mxu0 %v189
    %253 = vmatpush1.msra.mxu0 %v188
    %254 = vmatprep.subr.mxu0 %v191
    %255 = vmatpush1.msra.mxu0 %v190
    %256 = vmatprep.subr.mxu0 %v193
    %257 = vmatpush1.msra.mxu0 %v192
    %258 = vmatprep.subr.mxu0 %v195
    %259 = vmatpush1.msra.mxu0 %v194
    %260 = vmatprep.subr.mxu0 %v197
    %261 = vmatpush1.msra.mxu0 %v196
    %262 = vmatprep.subr.mxu0 %v199
    %263 = vmatpush1.msra.mxu0 %v198
    %264 = vmatprep.subr.mxu0 %v201
    %265 = vmatpush1.msra.mxu0 %v200
    %266 = vmatprep.subr.mxu0 %v203
    %267 = vmatpush1.msra.mxu0 %v202
    %268 = vmatprep.subr.mxu0 %v205
    %269 = vmatpush1.msra.mxu0 %v204
    %270 = vmatprep.subr.mxu0 %v207
    %271 = vmatpush1.msra.mxu0 %v206
    %272 = vmatprep.subr.mxu0 %v209
    %273 = vmatpush1.msra.mxu0 %v208
    %274 = vmatprep.subr.mxu0 %v211
    %275 = vmatpush1.msra.mxu0 %v210
    %276 = vmatprep.subr.mxu0 %v213
    %277 = vmatpush1.msra.mxu0 %v212
    %278 = vmatprep.subr.mxu0 %v215
    %279 = vmatpush1.msra.mxu0 %v214
    %280 = vmatprep.subr.mxu0 %v217
    %281 = vmatpush1.msra.mxu0 %v216
    %282 = vmatprep.subr.mxu0 %v219
    %283 = vmatpush1.msra.mxu0 %v218
    %284 = vmatprep.subr.mxu0 %v221
    %285 = vmatpush1.msra.mxu0 %v220
    %286 = vmatprep.subr.mxu0 %v223
    %287 = vmatpush1.msra.mxu0 %v222
    %288 = vmatprep.subr.mxu0 %v225
    %289 = vmatpush1.msra.mxu0 %v224
    %290 = vmatprep.subr.mxu0 %v227
    %291 = vmatpush1.msra.mxu0 %v226
    %292 = vmatprep.subr.mxu0 %v229
    %293 = vmatpush1.msra.mxu0 %v228
    %294 = vmatprep.subr.mxu0 %v231
    %295 = vmatpush1.msra.mxu0 %v230
    %296 = vmatprep.mubr.f32.mxu0 %v41
    %297 = vmatmul.mubr.f32.gmra.mrb[0].mxu0 %v40
    %v298 = vpop.f32.mrb[0].mxu0
    %v299 = vadd.f32 0.0, %v298
    %v300 = vpop.f32.mrb[0].mxu0
    %v301 = vadd.f32 0.0, %v300
    %302 = vmatprep.mubr.f32.mxu0 %v43
    %303 = vmatmul.mubr.f32.gmra.mrb[0].mxu0 %v42
    %v304 = vpop.f32.mrb[0].mxu0
    %v305 = vadd.f32 0.0, %v304
    %v306 = vpop.f32.mrb[0].mxu0
    %v307 = vadd.f32 0.0, %v306
    %308 = vmatprep.mubr.f32.mxu0 %v45
    %309 = vmatmul.mubr.f32.gmra.mrb[0].mxu0 %v44
    %v310 = vpop.f32.mrb[0].mxu0
    %v311 = vadd.f32 0.0, %v310
    %v312 = vpop.f32.mrb[0].mxu0
    %v313 = vadd.f32 0.0, %v312
    %314 = vmatprep.mubr.f32.mxu0 %v47
    %315 = vmatmul.mubr.f32.gmra.mrb[0].mxu0 %v46
    %v316 = vpop.f32.mrb[0].mxu0
    %v317 = vadd.f32 0.0, %v316
    %v318 = vpop.f32.mrb[0].mxu0
    %v319 = vadd.f32 0.0, %v318
    %320 = vmatprep.mubr.f32.mxu0 %v49
    %321 = vmatmul.mubr.f32.gmra.mrb[0].mxu0 %v48
    %v322 = vpop.f32.mrb[0].mxu0
    %v323 = vadd.f32 0.0, %v322
    %v324 = vpop.f32.mrb[0].mxu0
    %v325 = vadd.f32 0.0, %v324
    %326 = vmatprep.mubr.f32.mxu0 %v51
    %327 = vmatmul.mubr.f32.gmra.mrb[0].mxu0 %v50
    %v328 = vpop.f32.mrb[0].mxu0
    %v329 = vadd.f32 0.0, %v328
    %v330 = vpop.f32.mrb[0].mxu0
    %v331 = vadd.f32 0.0, %v330
    %332 = vmatprep.mubr.f32.mxu0 %v53
    %333 = vmatmul.mubr.f32.gmra.mrb[0].mxu0 %v52
    %v334 = vpop.f32.mrb[0].mxu0
    %v335 = vadd.f32 0.0, %v334
    %v336 = vpop.f32.mrb[0].mxu0
    %v337 = vadd.f32 0.0, %v336
    %338 = vmatprep.mubr.f32.mxu0 %v55
    %339 = vmatmul.mubr.f32.gmra.mrb[0].mxu0 %v54
    %v340 = vpop.f32.mrb[0].mxu0
    %v341 = vadd.f32 0.0, %v340
    %v342 = vpop.f32.mrb[0].mxu0
    %v343 = vadd.f32 0.0, %v342
    %344 = vmatprep.mubr.f32.mxu0 %v57
    %345 = vmatmul.mubr.f32.gmra.mrb[0].mxu0 %v56
    %v346 = vpop.f32.mrb[0].mxu0
    %v347 = vadd.f32 0.0, %v346
    %v348 = vpop.f32.mrb[0].mxu0
    %v349 = vadd.f32 0.0, %v348
    %350 = vmatprep.mubr.f32.mxu0 %v59
    %351 = vmatmul.mubr.f32.gmra.mrb[0].mxu0 %v58
    %v352 = vpop.f32.mrb[0].mxu0
    %v353 = vadd.f32 0.0, %v352
    %v354 = vpop.f32.mrb[0].mxu0
    %v355 = vadd.f32 0.0, %v354
    %356 = vmatprep.mubr.f32.mxu0 %v61
    %357 = vmatmul.mubr.f32.gmra.mrb[0].mxu0 %v60
    %v358 = vpop.f32.mrb[0].mxu0
    %v359 = vadd.f32 0.0, %v358
    %v360 = vpop.f32.mrb[0].mxu0
    %v361 = vadd.f32 0.0, %v360
    %362 = vmatprep.mubr.f32.mxu0 %v63
    %363 = vmatmul.mubr.f32.gmra.mrb[0].mxu0 %v62
    %v364 = vpop.f32.mrb[0].mxu0
    %v365 = vadd.f32 0.0, %v364
    %v366 = vpop.f32.mrb[0].mxu0
    %v367 = vadd.f32 0.0, %v366
    %368 = vmatprep.mubr.f32.mxu0 %v65
    %369 = vmatmul.mubr.f32.gmra.mrb[0].mxu0 %v64
    %v370 = vpop.f32.mrb[0].mxu0
    %v371 = vadd.f32 0.0, %v370
    %v372 = vpop.f32.mrb[0].mxu0
    %v373 = vadd.f32 0.0, %v372
    %374 = vmatprep.mubr.f32.mxu0 %v67
    %375 = vmatmul.mubr.f32.gmra.mrb[0].mxu0 %v66
    %v376 = vpop.f32.mrb[0].mxu0
    %v377 = vadd.f32 0.0, %v376
    %v378 = vpop.f32.mrb[0].mxu0
    %v379 = vadd.f32 0.0, %v378
    %380 = vmatprep.mubr.f32.mxu0 %v69
    %381 = vmatmul.mubr.f32.gmra.mrb[0].mxu0 %v68
    %v382 = vpop.f32.mrb[0].mxu0
    %v383 = vadd.f32 0.0, %v382
    %v384 = vpop.f32.mrb[0].mxu0
    %v385 = vadd.f32 0.0, %v384
    %386 = vmatprep.mubr.f32.mxu0 %v71
    %387 = vmatmul.mubr.f32.gmra.mrb[0].mxu0 %v70
    %v388 = vpop.f32.mrb[0].mxu0
    %v389 = vadd.f32 0.0, %v388
    %v390 = vpop.f32.mrb[0].mxu0
    %v391 = vadd.f32 0.0, %v390
    %392 = vmatprep.mubr.f32.mxu0 %v73
    %393 = vmatmul.mubr.f32.gmra.mrb[0].mxu0 %v72
    %v394 = vpop.f32.mrb[0].mxu0
    %v395 = vadd.f32 0.0, %v394
    %v396 = vpop.f32.mrb[0].mxu0
    %v397 = vadd.f32 0.0, %v396
    %398 = vmatprep.mubr.f32.mxu0 %v75
    %399 = vmatmul.mubr.f32.gmra.mrb[0].mxu0 %v74
    %v400 = vpop.f32.mrb[0].mxu0
    %v401 = vadd.f32 0.0, %v400
    %v402 = vpop.f32.mrb[0].mxu0
    %v403 = vadd.f32 0.0, %v402
    %404 = vmatprep.mubr.f32.mxu0 %v77
    %405 = vmatmul.mubr.f32.gmra.mrb[0].mxu0 %v76
    %v406 = vpop.f32.mrb[0].mxu0
    %v407 = vadd.f32 0.0, %v406
    %v408 = vpop.f32.mrb[0].mxu0
    %v409 = vadd.f32 0.0, %v408
    %410 = vmatprep.mubr.f32.mxu0 %v79
    %411 = vmatmul.mubr.f32.gmra.mrb[0].mxu0 %v78
    %v412 = vpop.f32.mrb[0].mxu0
    %v413 = vadd.f32 0.0, %v412
    %v414 = vpop.f32.mrb[0].mxu0
    %v415 = vadd.f32 0.0, %v414
    %416 = vmatprep.mubr.f32.mxu0 %v81
    %417 = vmatmul.mubr.f32.gmra.mrb[0].mxu0 %v80
    %v418 = vpop.f32.mrb[0].mxu0
    %v419 = vadd.f32 0.0, %v418
    %v420 = vpop.f32.mrb[0].mxu0
    %v421 = vadd.f32 0.0, %v420
    %422 = vmatprep.mubr.f32.mxu0 %v83
    %423 = vmatmul.mubr.f32.gmra.mrb[0].mxu0 %v82
    %v424 = vpop.f32.mrb[0].mxu0
    %v425 = vadd.f32 0.0, %v424
    %v426 = vpop.f32.mrb[0].mxu0
    %v427 = vadd.f32 0.0, %v426
    %428 = vmatprep.mubr.f32.mxu0 %v85
    %429 = vmatmul.mubr.f32.gmra.mrb[0].mxu0 %v84
    %v430 = vpop.f32.mrb[0].mxu0
    %v431 = vadd.f32 0.0, %v430
    %v432 = vpop.f32.mrb[0].mxu0
    %v433 = vadd.f32 0.0, %v432
    %434 = vmatprep.mubr.f32.mxu0 %v87
    %435 = vmatmul.mubr.f32.gmra.mrb[0].mxu0 %v86
    %v436 = vpop.f32.mrb[0].mxu0
    %v437 = vadd.f32 0.0, %v436
    %v438 = vpop.f32.mrb[0].mxu0
    %v439 = vadd.f32 0.0, %v438
    %440 = vmatprep.mubr.f32.mxu0 %v89
    %441 = vmatmul.mubr.f32.gmra.mrb[0].mxu0 %v88
    %v442 = vpop.f32.mrb[0].mxu0
    %v443 = vadd.f32 0.0, %v442
    %v444 = vpop.f32.mrb[0].mxu0
    %v445 = vadd.f32 0.0, %v444
    %446 = vmatprep.mubr.f32.mxu0 %v91
    %447 = vmatmul.mubr.f32.gmra.mrb[0].mxu0 %v90
    %v448 = vpop.f32.mrb[0].mxu0
    %v449 = vadd.f32 0.0, %v448
    %v450 = vpop.f32.mrb[0].mxu0
    %v451 = vadd.f32 0.0, %v450
    %452 = vmatprep.mubr.f32.mxu0 %v93
    %453 = vmatmul.mubr.f32.gmra.mrb[0].mxu0 %v92
    %v454 = vpop.f32.mrb[0].mxu0
    %v455 = vadd.f32 0.0, %v454
    %v456 = vpop.f32.mrb[0].mxu0
    %v457 = vadd.f32 0.0, %v456
    %458 = vmatprep.mubr.f32.mxu0 %v95
    %459 = vmatmul.mubr.f32.gmra.mrb[0].mxu0 %v94
    %v460 = vpop.f32.mrb[0].mxu0
    %v461 = vadd.f32 0.0, %v460
    %v462 = vpop.f32.mrb[0].mxu0
    %v463 = vadd.f32 0.0, %v462
    %464 = vmatprep.mubr.f32.mxu0 %v97
    %465 = vmatmul.mubr.f32.gmra.mrb[0].mxu0 %v96
    %v466 = vpop.f32.mrb[0].mxu0
    %v467 = vadd.f32 0.0, %v466
    %v468 = vpop.f32.mrb[0].mxu0
    %v469 = vadd.f32 0.0, %v468
    %470 = vmatprep.mubr.f32.mxu0 %v99
    %471 = vmatmul.mubr.f32.gmra.mrb[0].mxu0 %v98
    %v472 = vpop.f32.mrb[0].mxu0
    %v473 = vadd.f32 0.0, %v472
    %v474 = vpop.f32.mrb[0].mxu0
    %v475 = vadd.f32 0.0, %v474
    %476 = vmatprep.mubr.f32.mxu0 %v101
    %477 = vmatmul.mubr.f32.gmra.mrb[0].mxu0 %v100
    %v478 = vpop.f32.mrb[0].mxu0
    %v479 = vadd.f32 0.0, %v478
    %v480 = vpop.f32.mrb[0].mxu0
    %v481 = vadd.f32 0.0, %v480
    %482 = vmatprep.mubr.f32.mxu0 %v103
    %483 = vmatmul.mubr.f32.gmra.mrb[0].mxu0 %v102
    %v484 = vpop.f32.mrb[0].mxu0
    %v485 = vadd.f32 0.0, %v484
    %v486 = vpop.f32.mrb[0].mxu0
    %v487 = vadd.f32 0.0, %v486
    %488 = vmatprep.mubr.f32.mxu0 %v105
    %489 = vmatmul.mubr.f32.gmra.mrb[0].mxu0 %v104
    %v490 = vpop.f32.mrb[0].mxu0
    %v491 = vadd.f32 0.0, %v490
    %v492 = vpop.f32.mrb[0].mxu0
    %v493 = vadd.f32 0.0, %v492
    %494 = vmatprep.mubr.f32.mxu0 %v107
    %495 = vmatmul.mubr.f32.gmra.mrb[0].mxu0 %v106
    %v496 = vpop.f32.mrb[0].mxu0
    %v497 = vadd.f32 0.0, %v496
    %v498 = vpop.f32.mrb[0].mxu0
    %v499 = vadd.f32 0.0, %v498
    %500 = vmatprep.mubr.f32.mxu0 %v109
    %501 = vmatmul.mubr.f32.gmra.mrb[0].mxu0 %v108
    %v502 = vpop.f32.mrb[0].mxu0
    %v503 = vadd.f32 0.0, %v502
    %v504 = vpop.f32.mrb[0].mxu0
    %v505 = vadd.f32 0.0, %v504
    %506 = vmatprep.mubr.f32.mxu0 %v111
    %507 = vmatmul.mubr.f32.gmra.mrb[0].mxu0 %v110
    %v508 = vpop.f32.mrb[0].mxu0
    %v509 = vadd.f32 0.0, %v508
    %v510 = vpop.f32.mrb[0].mxu0
    %v511 = vadd.f32 0.0, %v510
    %512 = vmatprep.mubr.f32.mxu0 %v113
    %513 = vmatmul.mubr.f32.gmra.mrb[0].mxu0 %v112
    %v514 = vpop.f32.mrb[0].mxu0
    %v515 = vadd.f32 0.0, %v514
    %v516 = vpop.f32.mrb[0].mxu0
    %v517 = vadd.f32 0.0, %v516
    %518 = vmatprep.mubr.f32.mxu0 %v115
    %519 = vmatmul.mubr.f32.gmra.mrb[0].mxu0 %v114
    %v520 = vpop.f32.mrb[0].mxu0
    %v521 = vadd.f32 0.0, %v520
    %v522 = vpop.f32.mrb[0].mxu0
    %v523 = vadd.f32 0.0, %v522
    %524 = vmatprep.mubr.f32.mxu0 %v117
    %525 = vmatmul.mubr.f32.gmra.mrb[0].mxu0 %v116
    %v526 = vpop.f32.mrb[0].mxu0
    %v527 = vadd.f32 0.0, %v526
    %v528 = vpop.f32.mrb[0].mxu0
    %v529 = vadd.f32 0.0, %v528
    %530 = vmatprep.mubr.f32.mxu0 %v119
    %531 = vmatmul.mubr.f32.gmra.mrb[0].mxu0 %v118
    %v532 = vpop.f32.mrb[0].mxu0
    %v533 = vadd.f32 0.0, %v532
    %v534 = vpop.f32.mrb[0].mxu0
    %v535 = vadd.f32 0.0, %v534
    %536 = vmatprep.mubr.f32.mxu0 %v121
    %537 = vmatmul.mubr.f32.gmra.mrb[0].mxu0 %v120
    %v538 = vpop.f32.mrb[0].mxu0
    %v539 = vadd.f32 0.0, %v538
    %v540 = vpop.f32.mrb[0].mxu0
    %v541 = vadd.f32 0.0, %v540
    %542 = vmatprep.mubr.f32.mxu0 %v123
    %543 = vmatmul.mubr.f32.gmra.mrb[0].mxu0 %v122
    %v544 = vpop.f32.mrb[0].mxu0
    %v545 = vadd.f32 0.0, %v544
    %v546 = vpop.f32.mrb[0].mxu0
    %v547 = vadd.f32 0.0, %v546
    %548 = vmatprep.mubr.f32.mxu0 %v125
    %549 = vmatmul.mubr.f32.gmra.mrb[0].mxu0 %v124
    %v550 = vpop.f32.mrb[0].mxu0
    %v551 = vadd.f32 0.0, %v550
    %v552 = vpop.f32.mrb[0].mxu0
    %v553 = vadd.f32 0.0, %v552
    %554 = vmatprep.mubr.f32.mxu0 %v127
    %555 = vmatmul.mubr.f32.gmra.mrb[0].mxu0 %v126
    %v556 = vpop.f32.mrb[0].mxu0
    %v557 = vadd.f32 0.0, %v556
    %v558 = vpop.f32.mrb[0].mxu0
    %v559 = vadd.f32 0.0, %v558
    %560 = vmatprep.mubr.f32.mxu0 %v129
    %561 = vmatmul.mubr.f32.gmra.mrb[0].mxu0 %v128
    %v562 = vpop.f32.mrb[0].mxu0
    %v563 = vadd.f32 0.0, %v562
    %v564 = vpop.f32.mrb[0].mxu0
    %v565 = vadd.f32 0.0, %v564
    %566 = vmatprep.mubr.f32.mxu0 %v131
    %567 = vmatmul.mubr.f32.gmra.mrb[0].mxu0 %v130
    %v568 = vpop.f32.mrb[0].mxu0
    %v569 = vadd.f32 0.0, %v568
    %v570 = vpop.f32.mrb[0].mxu0
    %v571 = vadd.f32 0.0, %v570
    %572 = vmatprep.mubr.f32.mxu0 %v133
    %573 = vmatmul.mubr.f32.gmra.mrb[0].mxu0 %v132
    %v574 = vpop.f32.mrb[0].mxu0
    %v575 = vadd.f32 0.0, %v574
    %v576 = vpop.f32.mrb[0].mxu0
    %v577 = vadd.f32 0.0, %v576
    %578 = vmatprep.mubr.f32.mxu0 %v135
    %579 = vmatmul.mubr.f32.gmra.mrb[0].mxu0 %v134
    %v580 = vpop.f32.mrb[0].mxu0
    %v581 = vadd.f32 0.0, %v580
    %v582 = vpop.f32.mrb[0].mxu0
    %v583 = vadd.f32 0.0, %v582
    %584 = vmatprep.mubr.f32.mxu0 %v137
    %585 = vmatmul.mubr.f32.gmra.mrb[0].mxu0 %v136
    %v586 = vpop.f32.mrb[0].mxu0
    %v587 = vadd.f32 0.0, %v586
    %v588 = vpop.f32.mrb[0].mxu0
    %v589 = vadd.f32 0.0, %v588
    %590 = vmatprep.mubr.f32.mxu0 %v139
    %591 = vmatmul.mubr.f32.gmra.mrb[0].mxu0 %v138
    %v592 = vpop.f32.mrb[0].mxu0
    %v593 = vadd.f32 0.0, %v592
    %v594 = vpop.f32.mrb[0].mxu0
    %v595 = vadd.f32 0.0, %v594
    %596 = vmatprep.mubr.f32.mxu0 %v141
    %597 = vmatmul.mubr.f32.gmra.mrb[0].mxu0 %v140
    %v598 = vpop.f32.mrb[0].mxu0
    %v599 = vadd.f32 0.0, %v598
    %v600 = vpop.f32.mrb[0].mxu0
    %v601 = vadd.f32 0.0, %v600
    %602 = vmatprep.mubr.f32.mxu0 %v143
    %603 = vmatmul.mubr.f32.gmra.mrb[0].mxu0 %v142
    %v604 = vpop.f32.mrb[0].mxu0
    %v605 = vadd.f32 0.0, %v604
    %v606 = vpop.f32.mrb[0].mxu0
    %v607 = vadd.f32 0.0, %v606
    %608 = vmatprep.mubr.f32.mxu0 %v145
    %609 = vmatmul.mubr.f32.gmra.mrb[0].mxu0 %v144
    %v610 = vpop.f32.mrb[0].mxu0
    %v611 = vadd.f32 0.0, %v610
    %v612 = vpop.f32.mrb[0].mxu0
    %v613 = vadd.f32 0.0, %v612
    %614 = vmatprep.mubr.f32.mxu0 %v147
    %615 = vmatmul.mubr.f32.gmra.mrb[0].mxu0 %v146
    %v616 = vpop.f32.mrb[0].mxu0
    %v617 = vadd.f32 0.0, %v616
    %v618 = vpop.f32.mrb[0].mxu0
    %v619 = vadd.f32 0.0, %v618
    %620 = vmatprep.mubr.f32.mxu0 %v149
    %621 = vmatmul.mubr.f32.gmra.mrb[0].mxu0 %v148
    %v622 = vpop.f32.mrb[0].mxu0
    %v623 = vadd.f32 0.0, %v622
    %v624 = vpop.f32.mrb[0].mxu0
    %v625 = vadd.f32 0.0, %v624
    %626 = vmatprep.mubr.f32.mxu0 %v151
    %627 = vmatmul.mubr.f32.gmra.mrb[0].mxu0 %v150
    %v628 = vpop.f32.mrb[0].mxu0
    %v629 = vadd.f32 0.0, %v628
    %v630 = vpop.f32.mrb[0].mxu0
    %v631 = vadd.f32 0.0, %v630
    %632 = vmatprep.mubr.f32.mxu0 %v153
    %633 = vmatmul.mubr.f32.gmra.mrb[0].mxu0 %v152
    %v634 = vpop.f32.mrb[0].mxu0
    %v635 = vadd.f32 0.0, %v634
    %v636 = vpop.f32.mrb[0].mxu0
    %v637 = vadd.f32 0.0, %v636
    %638 = vmatprep.mubr.f32.mxu0 %v155
    %639 = vmatmul.mubr.f32.gmra.mrb[0].mxu0 %v154
    %v640 = vpop.f32.mrb[0].mxu0
    %v641 = vadd.f32 0.0, %v640
    %v642 = vpop.f32.mrb[0].mxu0
    %v643 = vadd.f32 0.0, %v642
    %644 = vmatprep.mubr.f32.mxu0 %v157
    %645 = vmatmul.mubr.f32.gmra.mrb[0].mxu0 %v156
    %v646 = vpop.f32.mrb[0].mxu0
    %v647 = vadd.f32 0.0, %v646
    %v648 = vpop.f32.mrb[0].mxu0
    %v649 = vadd.f32 0.0, %v648
    %650 = vmatprep.mubr.f32.mxu0 %v159
    %651 = vmatmul.mubr.f32.gmra.mrb[0].mxu0 %v158
    %v652 = vpop.f32.mrb[0].mxu0
    %v653 = vadd.f32 0.0, %v652
    %v654 = vpop.f32.mrb[0].mxu0
    %v655 = vadd.f32 0.0, %v654
    %656 = vmatprep.mubr.f32.mxu0 %v161
    %657 = vmatmul.mubr.f32.gmra.mrb[0].mxu0 %v160
    %v658 = vpop.f32.mrb[0].mxu0
    %v659 = vadd.f32 0.0, %v658
    %v660 = vpop.f32.mrb[0].mxu0
    %v661 = vadd.f32 0.0, %v660
    %662 = vmatprep.mubr.f32.mxu0 %v163
    %663 = vmatmul.mubr.f32.gmra.mrb[0].mxu0 %v162
    %v664 = vpop.f32.mrb[0].mxu0
    %v665 = vadd.f32 0.0, %v664
    %v666 = vpop.f32.mrb[0].mxu0
    %v667 = vadd.f32 0.0, %v666
    %668 = vmatprep.mubr.f32.mxu0 %v165
    %669 = vmatmul.mubr.f32.gmra.mrb[0].mxu0 %v164
    %v670 = vpop.f32.mrb[0].mxu0
    %v671 = vadd.f32 0.0, %v670
    %v672 = vpop.f32.mrb[0].mxu0
    %v673 = vadd.f32 0.0, %v672
    %674 = vmatprep.mubr.f32.mxu0 %v167
    %675 = vmatmul.mubr.f32.gmra.mrb[0].mxu0 %v166
    %v676 = vpop.f32.mrb[0].mxu0
    %v677 = vadd.f32 0.0, %v676
    %v678 = vpop.f32.mrb[0].mxu0
    %v679 = vadd.f32 0.0, %v678
    %680 = vdwg.mxu0
    %681 = vst [vmem:[#allocation7] sm:$0xff] %v299
    %682 = vst [vmem:[#allocation7 + $0x8] sm:$0xff] %v301
    %683 = vst [vmem:[#allocation7 + $0x10] sm:$0xff] %v305
    %684 = vst [vmem:[#allocation7 + $0x18] sm:$0xff] %v307
    %685 = vst [vmem:[#allocation7 + $0x20] sm:$0xff] %v311
    %686 = vst [vmem:[#allocation7 + $0x28] sm:$0xff] %v313
    %687 = vst [vmem:[#allocation7 + $0x30] sm:$0xff] %v317
    %688 = vst [vmem:[#allocation7 + $0x38] sm:$0xff] %v319
    %689 = vst [vmem:[#allocation7 + $0x40] sm:$0xff] %v323
    %690 = vst [vmem:[#allocation7 + $0x48] sm:$0xff] %v325
    %691 = vst [vmem:[#allocation7 + $0x50] sm:$0xff] %v329
    %692 = vst [vmem:[#allocation7 + $0x58] sm:$0xff] %v331
    %693 = vst [vmem:[#allocation7 + $0x60] sm:$0xff] %v335
    %694 = vst [vmem:[#allocation7 + $0x68] sm:$0xff] %v337
    %695 = vst [vmem:[#allocation7 + $0x70] sm:$0xff] %v341
    %696 = vst [vmem:[#allocation7 + $0x78] sm:$0xff] %v343
    %697 = vst [vmem:[#allocation7 + $0x80] sm:$0xff] %v347
    %698 = vst [vmem:[#allocation7 + $0x88] sm:$0xff] %v349
    %699 = vst [vmem:[#allocation7 + $0x90] sm:$0xff] %v353
    %700 = vst [vmem:[#allocation7 + $0x98] sm:$0xff] %v355
    %701 = vst [vmem:[#allocation7 + $0xa0] sm:$0xff] %v359
    %702 = vst [vmem:[#allocation7 + $0xa8] sm:$0xff] %v361
    %703 = vst [vmem:[#allocation7 + $0xb0] sm:$0xff] %v365
    %704 = vst [vmem:[#allocation7 + $0xb8] sm:$0xff] %v367
    %705 = vst [vmem:[#allocation7 + $0xc0] sm:$0xff] %v371
    %706 = vst [vmem:[#allocation7 + $0xc8] sm:$0xff] %v373
    %707 = vst [vmem:[#allocation7 + $0xd0] sm:$0xff] %v377
    %708 = vst [vmem:[#allocation7 + $0xd8] sm:$0xff] %v379
    %709 = vst [vmem:[#allocation7 + $0xe0] sm:$0xff] %v383
    %710 = vst [vmem:[#allocation7 + $0xe8] sm:$0xff] %v385
    %711 = vst [vmem:[#allocation7 + $0xf0] sm:$0xff] %v389
    %712 = vst [vmem:[#allocation7 + $0xf8] sm:$0xff] %v391
    %713 = vst [vmem:[#allocation7 + $0x100] sm:$0xff] %v395
    %714 = vst [vmem:[#allocation7 + $0x108] sm:$0xff] %v397
    %715 = vst [vmem:[#allocation7 + $0x110] sm:$0xff] %v401
    %716 = vst [vmem:[#allocation7 + $0x118] sm:$0xff] %v403
    %717 = vst [vmem:[#allocation7 + $0x120] sm:$0xff] %v407
    %718 = vst [vmem:[#allocation7 + $0x128] sm:$0xff] %v409
    %719 = vst [vmem:[#allocation7 + $0x130] sm:$0xff] %v413
    %720 = vst [vmem:[#allocation7 + $0x138] sm:$0xff] %v415
    %721 = vst [vmem:[#allocation7 + $0x140] sm:$0xff] %v419
    %722 = vst [vmem:[#allocation7 + $0x148] sm:$0xff] %v421
    %723 = vst [vmem:[#allocation7 + $0x150] sm:$0xff] %v425
    %724 = vst [vmem:[#allocation7 + $0x158] sm:$0xff] %v427
    %725 = vst [vmem:[#allocation7 + $0x160] sm:$0xff] %v431
    %726 = vst [vmem:[#allocation7 + $0x168] sm:$0xff] %v433
    %727 = vst [vmem:[#allocation7 + $0x170] sm:$0xff] %v437
    %728 = vst [vmem:[#allocation7 + $0x178] sm:$0xff] %v439
    %729 = vst [vmem:[#allocation7 + $0x180] sm:$0xff] %v443
    %730 = vst [vmem:[#allocation7 + $0x188] sm:$0xff] %v445
    %731 = vst [vmem:[#allocation7 + $0x190] sm:$0xff] %v449
    %732 = vst [vmem:[#allocation7 + $0x198] sm:$0xff] %v451
    %733 = vst [vmem:[#allocation7 + $0x1a0] sm:$0xff] %v455
    %734 = vst [vmem:[#allocation7 + $0x1a8] sm:$0xff] %v457
    %735 = vst [vmem:[#allocation7 + $0x1b0] sm:$0xff] %v461
    %736 = vst [vmem:[#allocation7 + $0x1b8] sm:$0xff] %v463
    %737 = vst [vmem:[#allocation7 + $0x1c0] sm:$0xff] %v467
    %738 = vst [vmem:[#allocation7 + $0x1c8] sm:$0xff] %v469
    %739 = vst [vmem:[#allocation7 + $0x1d0] sm:$0xff] %v473
    %740 = vst [vmem:[#allocation7 + $0x1d8] sm:$0xff] %v475
    %741 = vst [vmem:[#allocation7 + $0x1e0] sm:$0xff] %v479
    %742 = vst [vmem:[#allocation7 + $0x1e8] sm:$0xff] %v481
    %743 = vst [vmem:[#allocation7 + $0x1f0] sm:$0xff] %v485
    %744 = vst [vmem:[#allocation7 + $0x1f8] sm:$0xff] %v487
    %745 = vst [vmem:[#allocation7 + $0x200] sm:$0xff] %v491
    %746 = vst [vmem:[#allocation7 + $0x208] sm:$0xff] %v493
    %747 = vst [vmem:[#allocation7 + $0x210] sm:$0xff] %v497
    %748 = vst [vmem:[#allocation7 + $0x218] sm:$0xff] %v499
    %749 = vst [vmem:[#allocation7 + $0x220] sm:$0xff] %v503
    %750 = vst [vmem:[#allocation7 + $0x228] sm:$0xff] %v505
    %751 = vst [vmem:[#allocation7 + $0x230] sm:$0xff] %v509
    %752 = vst [vmem:[#allocation7 + $0x238] sm:$0xff] %v511
    %753 = vst [vmem:[#allocation7 + $0x240] sm:$0xff] %v515
    %754 = vst [vmem:[#allocation7 + $0x248] sm:$0xff] %v517
    %755 = vst [vmem:[#allocation7 + $0x250] sm:$0xff] %v521
    %756 = vst [vmem:[#allocation7 + $0x258] sm:$0xff] %v523
    %757 = vst [vmem:[#allocation7 + $0x260] sm:$0xff] %v527
    %758 = vst [vmem:[#allocation7 + $0x268] sm:$0xff] %v529
    %759 = vst [vmem:[#allocation7 + $0x270] sm:$0xff] %v533
    %760 = vst [vmem:[#allocation7 + $0x278] sm:$0xff] %v535
    %761 = vst [vmem:[#allocation7 + $0x280] sm:$0xff] %v539
    %762 = vst [vmem:[#allocation7 + $0x288] sm:$0xff] %v541
    %763 = vst [vmem:[#allocation7 + $0x290] sm:$0xff] %v545
    %764 = vst [vmem:[#allocation7 + $0x298] sm:$0xff] %v547
    %765 = vst [vmem:[#allocation7 + $0x2a0] sm:$0xff] %v551
    %766 = vst [vmem:[#allocation7 + $0x2a8] sm:$0xff] %v553
    %767 = vst [vmem:[#allocation7 + $0x2b0] sm:$0xff] %v557
    %768 = vst [vmem:[#allocation7 + $0x2b8] sm:$0xff] %v559
    %769 = vst [vmem:[#allocation7 + $0x2c0] sm:$0xff] %v563
    %770 = vst [vmem:[#allocation7 + $0x2c8] sm:$0xff] %v565
    %771 = vst [vmem:[#allocation7 + $0x2d0] sm:$0xff] %v569
    %772 = vst [vmem:[#allocation7 + $0x2d8] sm:$0xff] %v571
    %773 = vst [vmem:[#allocation7 + $0x2e0] sm:$0xff] %v575
    %774 = vst [vmem:[#allocation7 + $0x2e8] sm:$0xff] %v577
    %775 = vst [vmem:[#allocation7 + $0x2f0] sm:$0xff] %v581
    %776 = vst [vmem:[#allocation7 + $0x2f8] sm:$0xff] %v583
    %777 = vst [vmem:[#allocation7 + $0x300] sm:$0xff] %v587
    %778 = vst [vmem:[#allocation7 + $0x308] sm:$0xff] %v589
    %779 = vst [vmem:[#allocation7 + $0x310] sm:$0xff] %v593
    %780 = vst [vmem:[#allocation7 + $0x318] sm:$0xff] %v595
    %781 = vst [vmem:[#allocation7 + $0x320] sm:$0xff] %v599
    %782 = vst [vmem:[#allocation7 + $0x328] sm:$0xff] %v601
    %783 = vst [vmem:[#allocation7 + $0x330] sm:$0xff] %v605
    %784 = vst [vmem:[#allocation7 + $0x338] sm:$0xff] %v607
    %785 = vst [vmem:[#allocation7 + $0x340] sm:$0xff] %v611
    %786 = vst [vmem:[#allocation7 + $0x348] sm:$0xff] %v613
    %787 = vst [vmem:[#allocation7 + $0x350] sm:$0xff] %v617
    %788 = vst [vmem:[#allocation7 + $0x358] sm:$0xff] %v619
    %789 = vst [vmem:[#allocation7 + $0x360] sm:$0xff] %v623
    %790 = vst [vmem:[#allocation7 + $0x368] sm:$0xff] %v625
    %791 = vst [vmem:[#allocation7 + $0x370] sm:$0xff] %v629
    %792 = vst [vmem:[#allocation7 + $0x378] sm:$0xff] %v631
    %793 = vst [vmem:[#allocation7 + $0x380] sm:$0xff] %v635
    %794 = vst [vmem:[#allocation7 + $0x388] sm:$0xff] %v637
    %795 = vst [vmem:[#allocation7 + $0x390] sm:$0xff] %v641
    %796 = vst [vmem:[#allocation7 + $0x398] sm:$0xff] %v643
    %797 = vst [vmem:[#allocation7 + $0x3a0] sm:$0xff] %v647
    %798 = vst [vmem:[#allocation7 + $0x3a8] sm:$0xff] %v649
    %799 = vst [vmem:[#allocation7 + $0x3b0] sm:$0xff] %v653
    %800 = vst [vmem:[#allocation7 + $0x3b8] sm:$0xff] %v655
    %801 = vst [vmem:[#allocation7 + $0x3c0] sm:$0xff] %v659
    %802 = vst [vmem:[#allocation7 + $0x3c8] sm:$0xff] %v661
    %803 = vst [vmem:[#allocation7 + $0x3d0] sm:$0xff] %v665
    %804 = vst [vmem:[#allocation7 + $0x3d8] sm:$0xff] %v667
    %805 = vst [vmem:[#allocation7 + $0x3e0] sm:$0xff] %v671
    %806 = vst [vmem:[#allocation7 + $0x3e8] sm:$0xff] %v673
    %807 = vst [vmem:[#allocation7 + $0x3f0] sm:$0xff] %v677
    %808 = vst [vmem:[#allocation7 + $0x3f8] sm:$0xff] %v679
    // Predicated region
    $region18: #{tpu_custom_call.1} parent=1 // pred_check
      _
    $region19: #{tpu_custom_call.1} parent=1 // pred_check_branch
      %810 = sbr.rel (0) target = $region21
    $region20: #{tpu_custom_call.1} parent=1 // pred_region
      %s812 = ssub.s32 16384, 16384
      %813 = vsyncadd [#allocation4], %s812
      %s814 = sshll.u32 [#allocation7], 4
      %s815 = int_to_ptr.vmem [resolvable:$true] %s814
      %820 = dma.vmem_to_hbm [thread:$0]  %s815, 16384, %s2, [#allocation4], 256, 256, 16
    $region21: #{tpu_custom_call.1} parent=1 // pred_fallthru
      _
    // Predicated region
    $region22: #{tpu_custom_call.1} parent=1 // pred_check
      _
    $region23: #{tpu_custom_call.1} parent=1 // pred_check_branch
      %822 = sbr.rel (0) target = $region25
    $region24: #{tpu_custom_call.1} parent=1 // pred_region
      %823 = dma.done [#allocation4], 16384
    $region25: #{tpu_custom_call.1} parent=1 // pred_fallthru
      _
    %824 = vsyncpa [#allocation3], 1
    %825 = vsyncpa [#allocation6], 1
    %826 = vsyncpa [#allocation4], 1

</llo_original>
